<compile_context>
chip_gen: v7x
topology: tpu7x:2x2x1
jax: 0.10.0
libtpu: 0.0.40
codegen_flags: <defaults>
</compile_context>

<pallas_src>
import jax
import jax.numpy as jnp
from jax.experimental import pallas as pl
from jax.experimental.pallas import tpu as pltpu


def linear_seq_attn_kernel(x_ref, mask_ref, w_ref, out_ref):
    # x_ref:    (TB, L, H)  activations (f32 or bf16), H on lanes
    # mask_ref: (TB, 1, L)  float32, 1.0 == masked position
    # w_ref:    (1, 1, H)   nn.Linear(H, 1).weight (cast to x dtype)
    # out_ref:  (TB, 1, L)  float32 softmax attention weights
    tb, _, h = x_ref.shape
    w = jnp.broadcast_to(w_ref[...], (tb, 1, h))            # tiny, hoisted once

    # scores[b, 0, l] = sum_h w[h] * x[b, l, h]
    # Batched MXU matmul (same contraction pattern as flash-attention QK^T);
    # L lands on lanes so the softmax reductions below are small lane-reduces.
    scores = jnp.einsum(
        "boh,blh->bol", w, x_ref[...],
        preferred_element_type=jnp.float32,
        precision=jax.lax.Precision.HIGHEST)                 # (TB, 1, L) f32

    # masked_fill(mask, -inf)
    scores = jnp.where(mask_ref[...] > 0.5, jnp.float32(-jnp.inf), scores)

    # softmax over the sequence axis (lanes).
    m = jnp.max(scores, axis=-1, keepdims=True)              # (TB, 1, 1)
    e = jnp.exp(scores - m)
    s = jnp.sum(e, axis=-1, keepdims=True)                   # (TB, 1, 1)
    # Exact reciprocal on the (TB,1,1) denominator, then one multiply per
    # element (approx=True EUP rcp is ~2^-12 — too coarse for 1e-5 agreement).
    out_ref[...] = (e * pl.reciprocal(s)).astype(out_ref.dtype)


def _round_up(a, b):
    return (a + b - 1) // b * b


def _pick_block_b(B, L, H, itemsize):
    """Batch rows per grid step, sized off the padded VMEM footprint.

    Budget ~36 MiB total: 2x (x + mask + out) blocks (double buffering) plus
    the scores/exp temporaries and the broadcast w — safe on v7x's 64 MiB VMEM
    while keeping per-step DMA time well above the ~0.35 us step overhead.
    """
    lp = _round_up(L, 128)
    hp = _round_up(H, 128)
    x_row = _round_up(L, 8) * hp * itemsize            # x block, per batch row
    aux_row = 8 * lp * 4                               # one (1,L) f32 slab, padded
    # 2x x + 2x (mask+out) double-buffered, + scores/e temps + broadcast w.
    per_row = 2 * x_row + 6 * aux_row + 8 * hp * itemsize
    budget = 36 << 20
    tb = max(1, budget // per_row)
    if tb < B:
        return int(tb)
    # Whole batch fits in one step: if there is enough work, use >=2 parallel
    # steps so the batch axis can shard across v7x's two TensorCores.
    if B >= 2 and B * per_row > (2 << 20):
        return (B + 1) // 2
    return B


def linear_seq_attn(x, x_mask, weight, bias=None, *, block_b=None):
    """x: [B, L, H] float32 or bfloat16; x_mask: [B, L] bool (True = masked).
    weight: [1, H] (nn.Linear(H, 1).weight); bias: [1] (ignored: softmax is
    shift-invariant, so the returned alpha is mathematically identical).
    Returns alpha: [B, L] float32. Fully-masked rows return NaN, matching the
    PyTorch reference."""
    del bias
    B, L, H = x.shape

    mask3 = x_mask.astype(jnp.float32).reshape(B, 1, L)     # free XLA reshape
    w3 = weight.reshape(1, 1, H).astype(x.dtype)

    tb = block_b if block_b is not None else _pick_block_b(B, L, H,
                                                           x.dtype.itemsize)
    grid = (pl.cdiv(B, tb),)

    alpha3 = pl.pallas_call(
        linear_seq_attn_kernel,
        out_shape=jax.ShapeDtypeStruct((B, 1, L), jnp.float32),
        grid=grid,
        in_specs=[
            pl.BlockSpec((tb, L, H), lambda i: (i, 0, 0)),
            pl.BlockSpec((tb, 1, L), lambda i: (i, 0, 0)),
            pl.BlockSpec((1, 1, H), lambda i: (0, 0, 0)),
        ],
        out_specs=pl.BlockSpec((tb, 1, L), lambda i: (i, 0, 0)),
        compiler_params=pltpu.CompilerParams(
            dimension_semantics=("parallel",),
            vmem_limit_bytes=48 * 1024 * 1024),
    )(x, mask3, w3)

    return alpha3.reshape(B, L)


def linear_seq_attn_ref(x, x_mask, weight, bias):
    """Pure-JAX reference matching the PyTorch forward."""
    scores = jnp.einsum("blh,oh->blo", x.astype(jnp.float32),
                        weight.astype(jnp.float32),
                        precision=jax.lax.Precision.HIGHEST)[..., 0] + bias[0]
    scores = jnp.where(x_mask, -jnp.inf, scores)
    return jax.nn.softmax(scores, axis=1)


if __name__ == "__main__":
    B, L, H = 2, 8, 32

    key = jax.random.PRNGKey(0)
    kx, kw, kb = jax.random.split(key, 3)

    x = jax.random.normal(kx, (B, L, H), dtype=jnp.float32)

    # Deterministic "padding" mask: last positions of each row are masked,
    # never an entire row.
    lengths = jnp.array([6, 4], dtype=jnp.int32)                 # valid lengths
    pos = jnp.arange(L)[None, :]                                 # [1, L]
    x_mask = pos >= lengths[:, None]                             # [B, L] bool, True = pad

    # nn.Linear(H, 1) parameters: weight [1, H], bias [1]
    bound = 1.0 / (H ** 0.5)
    weight = jax.random.uniform(kw, (1, H), jnp.float32, -bound, bound)
    bias = jax.random.uniform(kb, (1,), jnp.float32, -bound, bound)

    alpha = linear_seq_attn(x, x_mask, weight, bias)
    alpha = jax.block_until_ready(alpha)

    alpha_ref = linear_seq_attn_ref(x, x_mask, weight, bias)
    assert alpha.shape == (B, L)
    assert jnp.allclose(alpha, alpha_ref, atol=1e-5, rtol=1e-5), (
        f"mismatch:\n{alpha}\nvs\n{alpha_ref}")

    print("KERNEL_OK")
</pallas_src>

<mosaic_0001>
module attributes {stable_mosaic.version = 11 : i64} {
  func.func @linear_seq_attn_kernel(%arg0: i32, %arg1: memref<2x8x32xf32, #tpu.memory_space<vmem>>, %arg2: memref<2x1x8xf32, #tpu.memory_space<vmem>>, %arg3: memref<1x1x32xf32, #tpu.memory_space<vmem>>, %arg4: memref<2x1x8xf32, #tpu.memory_space<vmem>>) attributes {dimension_semantics = [#tpu.dimension_semantics<parallel>], iteration_bounds = array<i64: 1>, scalar_prefetch = 0 : i64, scratch_operands = 0 : i64, tpu.core_type = #tpu.core_type<tc>, window_params = [{transform_indices = @transform_0, window_bounds = array<i64: 2, 8, 32>}, {transform_indices = @transform_1, window_bounds = array<i64: 2, 1, 8>}, {pipeline_mode = #tpu.pipeline_mode<synchronous>, transform_indices = @transform_2, window_bounds = array<i64: 1, 1, 32>}, {transform_indices = @transform_3, window_bounds = array<i64: 2, 1, 8>}]} {
    %c0 = arith.constant 0 : index
    %c0_0 = arith.constant 0 : index
    %c0_1 = arith.constant 0 : index
    %0 = vector.load %arg3[%c0, %c0_0, %c0_1] : memref<1x1x32xf32, #tpu.memory_space<vmem>>, vector<1x1x32xf32>
    %1 = vector.shape_cast %0 : vector<1x1x32xf32> to vector<1x1x32xf32>
    %2 = vector.broadcast %1 : vector<1x1x32xf32> to vector<2x1x32xf32>
    %c0_2 = arith.constant 0 : index
    %c0_3 = arith.constant 0 : index
    %c0_4 = arith.constant 0 : index
    %3 = vector.load %arg1[%c0_2, %c0_3, %c0_4] : memref<2x8x32xf32, #tpu.memory_space<vmem>>, vector<2x8x32xf32>
    "tpu.trace_start"() <{level = 10 : i32, message = "boh,blh->bol"}> : () -> ()
    %cst = arith.constant dense<0.000000e+00> : vector<2x1x8xf32>
    %4 = tpu.matmul %2, %3, %cst {dimension_numbers = #tpu.dot_dimension_numbers<[2], [2], [1], [1], [0, 0, 0, 1, 1, 1], [0], [0]>, precision = #tpu.contract_precision<fp32>} : vector<2x1x32xf32>, vector<2x8x32xf32>, vector<2x1x8xf32> -> vector<2x1x8xf32>
    "tpu.trace_stop"() : () -> ()
    %c0_5 = arith.constant 0 : index
    %c0_6 = arith.constant 0 : index
    %c0_7 = arith.constant 0 : index
    %5 = vector.load %arg2[%c0_5, %c0_6, %c0_7] : memref<2x1x8xf32, #tpu.memory_space<vmem>>, vector<2x1x8xf32>
    %cst_8 = arith.constant 5.000000e-01 : f32
    %6 = vector.broadcast %cst_8 : f32 to vector<2x1x8xf32>
    %7 = arith.cmpf ogt, %5, %6 : vector<2x1x8xf32>
    %cst_9 = arith.constant 0xFF800000 : f32
    %8 = vector.broadcast %cst_9 : f32 to vector<2x1x8xf32>
    %9 = arith.select %7, %8, %4 : vector<2x1x8xi1>, vector<2x1x8xf32>
    %cst_10 = arith.constant dense<0xFF800000> : vector<2x1xf32>
    %10 = vector.multi_reduction <maximumf>, %9, %cst_10 [2] : vector<2x1x8xf32> to vector<2x1xf32>
    %11 = vector.shape_cast %10 : vector<2x1xf32> to vector<2x1x1xf32>
    %12 = vector.broadcast %11 : vector<2x1x1xf32> to vector<2x1x8xf32>
    %13 = arith.subf %9, %12 : vector<2x1x8xf32>
    %14 = math.exp %13 : vector<2x1x8xf32>
    %cst_11 = arith.constant dense<0.000000e+00> : vector<2x1xf32>
    %15 = vector.multi_reduction <add>, %14, %cst_11 [2] : vector<2x1x8xf32> to vector<2x1xf32>
    %16 = vector.shape_cast %15 : vector<2x1xf32> to vector<2x1x1xf32>
    %17 = tpu.reciprocal %16 : vector<2x1x1xf32> -> vector<2x1x1xf32>
    %18 = vector.broadcast %17 : vector<2x1x1xf32> to vector<2x1x8xf32>
    %19 = arith.mulf %14, %18 : vector<2x1x8xf32>
    %c0_12 = arith.constant 0 : index
    %c0_13 = arith.constant 0 : index
    %c0_14 = arith.constant 0 : index
    %20 = vector.load %arg4[%c0_12, %c0_13, %c0_14] : memref<2x1x8xf32, #tpu.memory_space<vmem>>, vector<2x1x8xf32>
    tpu.vector_store %arg4[%c0_12, %c0_13, %c0_14], %19 {strides = array<i32>} : memref<2x1x8xf32, #tpu.memory_space<vmem>>, vector<2x1x8xf32>,
    return
  }
  func.func @transform_0(%arg0: i32) -> (i32, i32, i32) {
    %c0_i32 = arith.constant 0 : i32
    %c0_i32_0 = arith.constant 0 : i32
    %c0_i32_1 = arith.constant 0 : i32
    return %arg0, %c0_i32, %c0_i32_0 : i32, i32, i32
  }
  func.func @transform_1(%arg0: i32) -> (i32, i32, i32) {
    %c0_i32 = arith.constant 0 : i32
    %c0_i32_0 = arith.constant 0 : i32
    %c0_i32_1 = arith.constant 0 : i32
    return %arg0, %c0_i32, %c0_i32_0 : i32, i32, i32
  }
  func.func @transform_2(%arg0: i32) -> (i32, i32, i32) {
    %c0_i32 = arith.constant 0 : i32
    %c0_i32_0 = arith.constant 0 : i32
    %c0_i32_1 = arith.constant 0 : i32
    %c0_i32_2 = arith.constant 0 : i32
    return %c0_i32, %c0_i32_0, %c0_i32_1 : i32, i32, i32
  }
  func.func @transform_3(%arg0: i32) -> (i32, i32, i32) {
    %c0_i32 = arith.constant 0 : i32
    %c0_i32_0 = arith.constant 0 : i32
    %c0_i32_1 = arith.constant 0 : i32
    return %arg0, %c0_i32, %c0_i32_0 : i32, i32, i32
  }
}

</mosaic_0001>

<llo_original>
// kernel: tpu_custom_call.1
$region0: #{tpu_custom_call.1}
  #allocation0 [shape = 'u32[]', space=smem, size = 0x4, offset = 0x4, fixed_abs, tag = 'smem constant byte address 0x4 - core index']
  #allocation1 [shape = 'u32[144,128]{1,0:T(1,128)}', space=vmem, size = 0x12000, scoped, tag = 'internal scratch']
  %s0 = inlined_call_operand.hbm [shape: f32[2,8,32], index: 0, kind: input, shape index: {}]
  %s1 = inlined_call_operand.vmem [shape: f32[2,1,8], index: 1, kind: input, shape index: {}]
  %s2 = inlined_call_operand.vmem [shape: f32[1,1,32], index: 2, kind: input, shape index: {}]
  %s3 = inlined_call_operand.hbm [shape: f32[2,1,8], index: 3, kind: output, shape index: {}]
  %s4 = sld [smem:[#allocation0]]
  $region26: #{tpu_custom_call.1} parent=0
    _
  %s6 = ssub.s32 1, %s4
  %s7 = scalar_select 0, %s6, %s4
  $region1: #{tpu_custom_call.1} parent=0
    #allocation2 [shape = 'u8[8192]{0}', space=vmem, size = 0x2000, scoped, tag = 'input window, operand 0, single buffered']
    #allocation3 [shape = 's32[1]{0}', space=sflag, size = 0x4, scoped, tag = 'scoped memory for tpu_custom_call.1']
    #allocation4 [shape = 's32[1]{0}', space=sflag, size = 0x4, scoped, tag = 'scoped memory for tpu_custom_call.1']
    #allocation5 [shape = 'u8[1024]{0}', space=vmem, size = 0x400, scoped, tag = 'output window, operand 0, single buffered']
    %8 = vsyncpa [#allocation3], 0
    %9 = vsyncpa [#allocation4], 0
    // Predicated region
    $region2: #{tpu_custom_call.1} parent=1 // pred_check
      _
    $region3: #{tpu_custom_call.1} parent=1 // pred_check_branch
      %11 = sbr.rel (0) target = $region5
    $region4: #{tpu_custom_call.1} parent=1 // pred_region
      %s13 = ssub.s32 256, 256
      %14 = vsyncadd [#allocation3], %s13
      %s15 = sshll.u32 [#allocation2], 4
      %s16 = int_to_ptr.vmem [resolvable:$true] %s15
      %21 = dma.hbm_to_vmem [thread:$0]  %s0, 256, %s16, [#allocation3], 128, 128, 8
    $region5: #{tpu_custom_call.1} parent=1 // pred_fallthru
      _
    // Predicated region
    $region6: #{tpu_custom_call.1} parent=1 // pred_check
      _
    $region7: #{tpu_custom_call.1} parent=1 // pred_check_branch
      %23 = sbr.rel (0) target = $region9
    $region8: #{tpu_custom_call.1} parent=1 // pred_region
      _
    $region9: #{tpu_custom_call.1} parent=1 // pred_fallthru
      _
    // Predicated region
    $region10: #{tpu_custom_call.1} parent=1 // pred_check
      _
    $region11: #{tpu_custom_call.1} parent=1 // pred_check_branch
      %25 = sbr.rel (0) target = $region13
    $region12: #{tpu_custom_call.1} parent=1 // pred_region
      _
    $region13: #{tpu_custom_call.1} parent=1 // pred_fallthru
      _
    // Predicated region
    $region14: #{tpu_custom_call.1} parent=1 // pred_check
      _
    $region15: #{tpu_custom_call.1} parent=1 // pred_check_branch
      %27 = sbr.rel (0) target = $region17
    $region16: #{tpu_custom_call.1} parent=1 // pred_region
      %28 = dma.done [#allocation3], 256
    $region17: #{tpu_custom_call.1} parent=1 // pred_fallthru
      _
    %v29 = vld [vmem:[%s2] sm:$0x1]
    %v30 = vld [vmem:[#allocation2] sm:$0xff]
    %v31 = vld [vmem:[#allocation2 + $0x8] sm:$0xff]
    %vm32 = vcmask 261120
    %v34 = vsel %vm32, %v29, 0
    %v37 = vsel %vm32, %v30, 0
    %39 = vmatprep.subr.mxu0 0.0
    %v40 = vand.u32 %v37, 4294901760
    %41 = vmatpush1.xpose.msra.mxu0 %v40
    %42 = vmatprep.subr.mxu0 0.0
    %43 = vmatpush1.xpose.msra.mxu0 0.0
    %44 = vmatprep.subr.mxu0 0.0
    %45 = vmatpush1.xpose.msra.mxu0 0.0
    %46 = vmatprep.subr.mxu0 0.0
    %47 = vmatpush1.xpose.msra.mxu0 0.0
    %48 = vmatprep.subr.mxu0 0.0
    %49 = vmatpush1.xpose.msra.mxu0 0.0
    %50 = vmatprep.subr.mxu0 0.0
    %51 = vmatpush1.xpose.msra.mxu0 0.0
    %52 = vmatprep.subr.mxu0 0.0
    %53 = vmatpush1.xpose.msra.mxu0 0.0
    %54 = vmatprep.subr.mxu0 0.0
    %55 = vmatpush1.xpose.msra.mxu0 0.0
    %56 = vmatprep.subr.mxu0 0.0
    %57 = vmatpush1.xpose.msra.mxu0 0.0
    %58 = vmatprep.subr.mxu0 0.0
    %59 = vmatpush1.xpose.msra.mxu0 0.0
    %60 = vmatprep.subr.mxu0 0.0
    %61 = vmatpush1.xpose.msra.mxu0 0.0
    %62 = vmatprep.subr.mxu0 0.0
    %63 = vmatpush1.xpose.msra.mxu0 0.0
    %64 = vmatprep.subr.mxu0 0.0
    %65 = vmatpush1.xpose.msra.mxu0 0.0
    %66 = vmatprep.subr.mxu0 0.0
    %67 = vmatpush1.xpose.msra.mxu0 0.0
    %68 = vmatprep.subr.mxu0 0.0
    %69 = vmatpush1.xpose.msra.mxu0 0.0
    %70 = vmatprep.subr.mxu0 0.0
    %71 = vmatpush1.xpose.msra.mxu0 0.0
    %72 = vmatprep.subr.mxu0 0.0
    %73 = vmatpush1.xpose.msra.mxu0 0.0
    %74 = vmatprep.subr.mxu0 0.0
    %75 = vmatpush1.xpose.msra.mxu0 0.0
    %76 = vmatprep.subr.mxu0 0.0
    %77 = vmatpush1.xpose.msra.mxu0 0.0
    %78 = vmatprep.subr.mxu0 0.0
    %79 = vmatpush1.xpose.msra.mxu0 0.0
    %80 = vmatprep.subr.mxu0 0.0
    %81 = vmatpush1.xpose.msra.mxu0 0.0
    %82 = vmatprep.subr.mxu0 0.0
    %83 = vmatpush1.xpose.msra.mxu0 0.0
    %84 = vmatprep.subr.mxu0 0.0
    %85 = vmatpush1.xpose.msra.mxu0 0.0
    %86 = vmatprep.subr.mxu0 0.0
    %87 = vmatpush1.xpose.msra.mxu0 0.0
    %88 = vmatprep.subr.mxu0 0.0
    %89 = vmatpush1.xpose.msra.mxu0 0.0
    %90 = vmatprep.subr.mxu0 0.0
    %91 = vmatpush1.xpose.msra.mxu0 0.0
    %92 = vmatprep.subr.mxu0 0.0
    %93 = vmatpush1.xpose.msra.mxu0 0.0
    %94 = vmatprep.subr.mxu0 0.0
    %95 = vmatpush1.xpose.msra.mxu0 0.0
    %96 = vmatprep.subr.mxu0 0.0
    %97 = vmatpush1.xpose.msra.mxu0 0.0
    %98 = vmatprep.subr.mxu0 0.0
    %99 = vmatpush1.xpose.msra.mxu0 0.0
    %100 = vmatprep.subr.mxu0 0.0
    %101 = vmatpush1.xpose.msra.mxu0 0.0
    %102 = vmatprep.subr.mxu0 0.0
    %103 = vmatpush1.xpose.msra.mxu0 0.0
    %104 = vmatprep.mubr.f32.mxu0 0.0
    %v105 = vand.u32 %v34, 4294901760
    %v106 = vsub.f32 %v34, %v105
    %v107 = vand.u32 %v106, 4294901760
    %v108 = vsub.f32 %v106, %v107
    %v109 = vand.u32 %v108, 4294901760
    %110 = vmatmul.mubr.f32.gmra.mrb[0].mxu0 %v109
    %v111 = vpop.f32.mrb[0].mxu0
    %v112 = vadd.f32 0.0, %v111
    %v113 = vpop.f32.mrb[0].mxu0
    %114 = vdwg.mxu0
    %115 = vmatprep.subr.mxu0 0.0
    %v116 = vand.u32 %v37, 4294901760
    %v117 = vsub.f32 %v37, %v116
    %v118 = vand.u32 %v117, 4294901760
    %v119 = vsub.f32 %v117, %v118
    %v120 = vand.u32 %v119, 4294901760
    %121 = vmatpush1.xpose.msra.mxu0 %v120
    %122 = vmatprep.subr.mxu0 0.0
    %123 = vmatpush1.xpose.msra.mxu0 0.0
    %124 = vmatprep.subr.mxu0 0.0
    %125 = vmatpush1.xpose.msra.mxu0 0.0
    %126 = vmatprep.subr.mxu0 0.0
    %127 = vmatpush1.xpose.msra.mxu0 0.0
    %128 = vmatprep.subr.mxu0 0.0
    %129 = vmatpush1.xpose.msra.mxu0 0.0
    %130 = vmatprep.subr.mxu0 0.0
    %131 = vmatpush1.xpose.msra.mxu0 0.0
    %132 = vmatprep.subr.mxu0 0.0
    %133 = vmatpush1.xpose.msra.mxu0 0.0
    %134 = vmatprep.subr.mxu0 0.0
    %135 = vmatpush1.xpose.msra.mxu0 0.0
    %136 = vmatprep.subr.mxu0 0.0
    %137 = vmatpush1.xpose.msra.mxu0 0.0
    %138 = vmatprep.subr.mxu0 0.0
    %139 = vmatpush1.xpose.msra.mxu0 0.0
    %140 = vmatprep.subr.mxu0 0.0
    %141 = vmatpush1.xpose.msra.mxu0 0.0
    %142 = vmatprep.subr.mxu0 0.0
    %143 = vmatpush1.xpose.msra.mxu0 0.0
    %144 = vmatprep.subr.mxu0 0.0
    %145 = vmatpush1.xpose.msra.mxu0 0.0
    %146 = vmatprep.subr.mxu0 0.0
    %147 = vmatpush1.xpose.msra.mxu0 0.0
    %148 = vmatprep.subr.mxu0 0.0
    %149 = vmatpush1.xpose.msra.mxu0 0.0
    %150 = vmatprep.subr.mxu0 0.0
    %151 = vmatpush1.xpose.msra.mxu0 0.0
    %152 = vmatprep.subr.mxu0 0.0
    %153 = vmatpush1.xpose.msra.mxu0 0.0
    %154 = vmatprep.subr.mxu0 0.0
    %155 = vmatpush1.xpose.msra.mxu0 0.0
    %156 = vmatprep.subr.mxu0 0.0
    %157 = vmatpush1.xpose.msra.mxu0 0.0
    %158 = vmatprep.subr.mxu0 0.0
    %159 = vmatpush1.xpose.msra.mxu0 0.0
    %160 = vmatprep.subr.mxu0 0.0
    %161 = vmatpush1.xpose.msra.mxu0 0.0
    %162 = vmatprep.subr.mxu0 0.0
    %163 = vmatpush1.xpose.msra.mxu0 0.0
    %164 = vmatprep.subr.mxu0 0.0
    %165 = vmatpush1.xpose.msra.mxu0 0.0
    %166 = vmatprep.subr.mxu0 0.0
    %167 = vmatpush1.xpose.msra.mxu0 0.0
    %168 = vmatprep.subr.mxu0 0.0
    %169 = vmatpush1.xpose.msra.mxu0 0.0
    %170 = vmatprep.subr.mxu0 0.0
    %171 = vmatpush1.xpose.msra.mxu0 0.0
    %172 = vmatprep.subr.mxu0 0.0
    %173 = vmatpush1.xpose.msra.mxu0 0.0
    %174 = vmatprep.subr.mxu0 0.0
    %175 = vmatpush1.xpose.msra.mxu0 0.0
    %176 = vmatprep.subr.mxu0 0.0
    %177 = vmatpush1.xpose.msra.mxu0 0.0
    %178 = vmatprep.subr.mxu0 0.0
    %179 = vmatpush1.xpose.msra.mxu0 0.0
    %180 = vmatprep.subr.mxu0 0.0
    %181 = vmatpush1.xpose.msra.mxu0 0.0
    %182 = vmatprep.subr.mxu0 0.0
    %183 = vmatpush1.xpose.msra.mxu0 0.0
    %184 = vmatprep.mubr.f32.mxu0 0.0
    %v185 = vand.u32 %v34, 4294901760
    %186 = vmatmul.mubr.f32.gmra.mrb[0].mxu0 %v185
    %v187 = vpop.f32.mrb[0].mxu0
    %v188 = vadd.f32 %v112, %v187
    %v189 = vpop.f32.mrb[0].mxu0
    %190 = vdwg.mxu0
    %191 = vmatprep.subr.mxu0 0.0
    %v192 = vand.u32 %v37, 4294901760
    %v193 = vsub.f32 %v37, %v192
    %194 = vmatpush1.xpose.msra.mxu0 %v193
    %195 = vmatprep.subr.mxu0 0.0
    %196 = vmatpush1.xpose.msra.mxu0 0.0
    %197 = vmatprep.subr.mxu0 0.0
    %198 = vmatpush1.xpose.msra.mxu0 0.0
    %199 = vmatprep.subr.mxu0 0.0
    %200 = vmatpush1.xpose.msra.mxu0 0.0
    %201 = vmatprep.subr.mxu0 0.0
    %202 = vmatpush1.xpose.msra.mxu0 0.0
    %203 = vmatprep.subr.mxu0 0.0
    %204 = vmatpush1.xpose.msra.mxu0 0.0
    %205 = vmatprep.subr.mxu0 0.0
    %206 = vmatpush1.xpose.msra.mxu0 0.0
    %207 = vmatprep.subr.mxu0 0.0
    %208 = vmatpush1.xpose.msra.mxu0 0.0
    %209 = vmatprep.subr.mxu0 0.0
    %210 = vmatpush1.xpose.msra.mxu0 0.0
    %211 = vmatprep.subr.mxu0 0.0
    %212 = vmatpush1.xpose.msra.mxu0 0.0
    %213 = vmatprep.subr.mxu0 0.0
    %214 = vmatpush1.xpose.msra.mxu0 0.0
    %215 = vmatprep.subr.mxu0 0.0
    %216 = vmatpush1.xpose.msra.mxu0 0.0
    %217 = vmatprep.subr.mxu0 0.0
    %218 = vmatpush1.xpose.msra.mxu0 0.0
    %219 = vmatprep.subr.mxu0 0.0
    %220 = vmatpush1.xpose.msra.mxu0 0.0
    %221 = vmatprep.subr.mxu0 0.0
    %222 = vmatpush1.xpose.msra.mxu0 0.0
    %223 = vmatprep.subr.mxu0 0.0
    %224 = vmatpush1.xpose.msra.mxu0 0.0
    %225 = vmatprep.subr.mxu0 0.0
    %226 = vmatpush1.xpose.msra.mxu0 0.0
    %227 = vmatprep.subr.mxu0 0.0
    %228 = vmatpush1.xpose.msra.mxu0 0.0
    %229 = vmatprep.subr.mxu0 0.0
    %230 = vmatpush1.xpose.msra.mxu0 0.0
    %231 = vmatprep.subr.mxu0 0.0
    %232 = vmatpush1.xpose.msra.mxu0 0.0
    %233 = vmatprep.subr.mxu0 0.0
    %234 = vmatpush1.xpose.msra.mxu0 0.0
    %235 = vmatprep.subr.mxu0 0.0
    %236 = vmatpush1.xpose.msra.mxu0 0.0
    %237 = vmatprep.subr.mxu0 0.0
    %238 = vmatpush1.xpose.msra.mxu0 0.0
    %239 = vmatprep.subr.mxu0 0.0
    %240 = vmatpush1.xpose.msra.mxu0 0.0
    %241 = vmatprep.subr.mxu0 0.0
    %242 = vmatpush1.xpose.msra.mxu0 0.0
    %243 = vmatprep.subr.mxu0 0.0
    %244 = vmatpush1.xpose.msra.mxu0 0.0
    %245 = vmatprep.subr.mxu0 0.0
    %246 = vmatpush1.xpose.msra.mxu0 0.0
    %247 = vmatprep.subr.mxu0 0.0
    %248 = vmatpush1.xpose.msra.mxu0 0.0
    %249 = vmatprep.subr.mxu0 0.0
    %250 = vmatpush1.xpose.msra.mxu0 0.0
    %251 = vmatprep.subr.mxu0 0.0
    %252 = vmatpush1.xpose.msra.mxu0 0.0
    %253 = vmatprep.subr.mxu0 0.0
    %254 = vmatpush1.xpose.msra.mxu0 0.0
    %255 = vmatprep.subr.mxu0 0.0
    %256 = vmatpush1.xpose.msra.mxu0 0.0
    %257 = vmatprep.mubr.f32.mxu0 0.0
    %v258 = vand.u32 %v34, 4294901760
    %v259 = vsub.f32 %v34, %v258
    %260 = vmatmul.mubr.f32.gmra.mrb[0].mxu0 %v259
    %v261 = vpop.f32.mrb[0].mxu0
    %v262 = vadd.f32 %v188, %v261
    %v263 = vpop.f32.mrb[0].mxu0
    %264 = vdwg.mxu0
    %265 = vmatprep.subr.mxu0 0.0
    %v266 = vand.u32 %v37, 4294901760
    %267 = vmatpush1.xpose.msra.mxu0 %v266
    %268 = vmatprep.subr.mxu0 0.0
    %269 = vmatpush1.xpose.msra.mxu0 0.0
    %270 = vmatprep.subr.mxu0 0.0
    %271 = vmatpush1.xpose.msra.mxu0 0.0
    %272 = vmatprep.subr.mxu0 0.0
    %273 = vmatpush1.xpose.msra.mxu0 0.0
    %274 = vmatprep.subr.mxu0 0.0
    %275 = vmatpush1.xpose.msra.mxu0 0.0
    %276 = vmatprep.subr.mxu0 0.0
    %277 = vmatpush1.xpose.msra.mxu0 0.0
    %278 = vmatprep.subr.mxu0 0.0
    %279 = vmatpush1.xpose.msra.mxu0 0.0
    %280 = vmatprep.subr.mxu0 0.0
    %281 = vmatpush1.xpose.msra.mxu0 0.0
    %282 = vmatprep.subr.mxu0 0.0
    %283 = vmatpush1.xpose.msra.mxu0 0.0
    %284 = vmatprep.subr.mxu0 0.0
    %285 = vmatpush1.xpose.msra.mxu0 0.0
    %286 = vmatprep.subr.mxu0 0.0
    %287 = vmatpush1.xpose.msra.mxu0 0.0
    %288 = vmatprep.subr.mxu0 0.0
    %289 = vmatpush1.xpose.msra.mxu0 0.0
    %290 = vmatprep.subr.mxu0 0.0
    %291 = vmatpush1.xpose.msra.mxu0 0.0
    %292 = vmatprep.subr.mxu0 0.0
    %293 = vmatpush1.xpose.msra.mxu0 0.0
    %294 = vmatprep.subr.mxu0 0.0
    %295 = vmatpush1.xpose.msra.mxu0 0.0
    %296 = vmatprep.subr.mxu0 0.0
    %297 = vmatpush1.xpose.msra.mxu0 0.0
    %298 = vmatprep.subr.mxu0 0.0
    %299 = vmatpush1.xpose.msra.mxu0 0.0
    %300 = vmatprep.subr.mxu0 0.0
    %301 = vmatpush1.xpose.msra.mxu0 0.0
    %302 = vmatprep.subr.mxu0 0.0
    %303 = vmatpush1.xpose.msra.mxu0 0.0
    %304 = vmatprep.subr.mxu0 0.0
    %305 = vmatpush1.xpose.msra.mxu0 0.0
    %306 = vmatprep.subr.mxu0 0.0
    %307 = vmatpush1.xpose.msra.mxu0 0.0
    %308 = vmatprep.subr.mxu0 0.0
    %309 = vmatpush1.xpose.msra.mxu0 0.0
    %310 = vmatprep.subr.mxu0 0.0
    %311 = vmatpush1.xpose.msra.mxu0 0.0
    %312 = vmatprep.subr.mxu0 0.0
    %313 = vmatpush1.xpose.msra.mxu0 0.0
    %314 = vmatprep.subr.mxu0 0.0
    %315 = vmatpush1.xpose.msra.mxu0 0.0
    %316 = vmatprep.subr.mxu0 0.0
    %317 = vmatpush1.xpose.msra.mxu0 0.0
    %318 = vmatprep.subr.mxu0 0.0
    %319 = vmatpush1.xpose.msra.mxu0 0.0
    %320 = vmatprep.subr.mxu0 0.0
    %321 = vmatpush1.xpose.msra.mxu0 0.0
    %322 = vmatprep.subr.mxu0 0.0
    %323 = vmatpush1.xpose.msra.mxu0 0.0
    %324 = vmatprep.subr.mxu0 0.0
    %325 = vmatpush1.xpose.msra.mxu0 0.0
    %326 = vmatprep.subr.mxu0 0.0
    %327 = vmatpush1.xpose.msra.mxu0 0.0
    %328 = vmatprep.subr.mxu0 0.0
    %329 = vmatpush1.xpose.msra.mxu0 0.0
    %330 = vmatprep.mubr.f32.mxu0 0.0
    %v331 = vand.u32 %v34, 4294901760
    %v332 = vsub.f32 %v34, %v331
    %v333 = vand.u32 %v332, 4294901760
    %334 = vmatmul.mubr.f32.gmra.mrb[0].mxu0 %v333
    %v335 = vpop.f32.mrb[0].mxu0
    %v336 = vadd.f32 %v262, %v335
    %v337 = vpop.f32.mrb[0].mxu0
    %338 = vdwg.mxu0
    %339 = vmatprep.subr.mxu0 0.0
    %v340 = vand.u32 %v37, 4294901760
    %v341 = vsub.f32 %v37, %v340
    %v342 = vand.u32 %v341, 4294901760
    %343 = vmatpush1.xpose.msra.mxu0 %v342
    %344 = vmatprep.subr.mxu0 0.0
    %345 = vmatpush1.xpose.msra.mxu0 0.0
    %346 = vmatprep.subr.mxu0 0.0
    %347 = vmatpush1.xpose.msra.mxu0 0.0
    %348 = vmatprep.subr.mxu0 0.0
    %349 = vmatpush1.xpose.msra.mxu0 0.0
    %350 = vmatprep.subr.mxu0 0.0
    %351 = vmatpush1.xpose.msra.mxu0 0.0
    %352 = vmatprep.subr.mxu0 0.0
    %353 = vmatpush1.xpose.msra.mxu0 0.0
    %354 = vmatprep.subr.mxu0 0.0
    %355 = vmatpush1.xpose.msra.mxu0 0.0
    %356 = vmatprep.subr.mxu0 0.0
    %357 = vmatpush1.xpose.msra.mxu0 0.0
    %358 = vmatprep.subr.mxu0 0.0
    %359 = vmatpush1.xpose.msra.mxu0 0.0
    %360 = vmatprep.subr.mxu0 0.0
    %361 = vmatpush1.xpose.msra.mxu0 0.0
    %362 = vmatprep.subr.mxu0 0.0
    %363 = vmatpush1.xpose.msra.mxu0 0.0
    %364 = vmatprep.subr.mxu0 0.0
    %365 = vmatpush1.xpose.msra.mxu0 0.0
    %366 = vmatprep.subr.mxu0 0.0
    %367 = vmatpush1.xpose.msra.mxu0 0.0
    %368 = vmatprep.subr.mxu0 0.0
    %369 = vmatpush1.xpose.msra.mxu0 0.0
    %370 = vmatprep.subr.mxu0 0.0
    %371 = vmatpush1.xpose.msra.mxu0 0.0
    %372 = vmatprep.subr.mxu0 0.0
    %373 = vmatpush1.xpose.msra.mxu0 0.0
    %374 = vmatprep.subr.mxu0 0.0
    %375 = vmatpush1.xpose.msra.mxu0 0.0
    %376 = vmatprep.subr.mxu0 0.0
    %377 = vmatpush1.xpose.msra.mxu0 0.0
    %378 = vmatprep.subr.mxu0 0.0
    %379 = vmatpush1.xpose.msra.mxu0 0.0
    %380 = vmatprep.subr.mxu0 0.0
    %381 = vmatpush1.xpose.msra.mxu0 0.0
    %382 = vmatprep.subr.mxu0 0.0
    %383 = vmatpush1.xpose.msra.mxu0 0.0
    %384 = vmatprep.subr.mxu0 0.0
    %385 = vmatpush1.xpose.msra.mxu0 0.0
    %386 = vmatprep.subr.mxu0 0.0
    %387 = vmatpush1.xpose.msra.mxu0 0.0
    %388 = vmatprep.subr.mxu0 0.0
    %389 = vmatpush1.xpose.msra.mxu0 0.0
    %390 = vmatprep.subr.mxu0 0.0
    %391 = vmatpush1.xpose.msra.mxu0 0.0
    %392 = vmatprep.subr.mxu0 0.0
    %393 = vmatpush1.xpose.msra.mxu0 0.0
    %394 = vmatprep.subr.mxu0 0.0
    %395 = vmatpush1.xpose.msra.mxu0 0.0
    %396 = vmatprep.subr.mxu0 0.0
    %397 = vmatpush1.xpose.msra.mxu0 0.0
    %398 = vmatprep.subr.mxu0 0.0
    %399 = vmatpush1.xpose.msra.mxu0 0.0
    %400 = vmatprep.subr.mxu0 0.0
    %401 = vmatpush1.xpose.msra.mxu0 0.0
    %402 = vmatprep.subr.mxu0 0.0
    %403 = vmatpush1.xpose.msra.mxu0 0.0
    %404 = vmatprep.subr.mxu0 0.0
    %405 = vmatpush1.xpose.msra.mxu0 0.0
    %406 = vmatprep.mubr.f32.mxu0 0.0
    %v407 = vand.u32 %v34, 4294901760
    %408 = vmatmul.mubr.f32.gmra.mrb[0].mxu0 %v407
    %v409 = vpop.f32.mrb[0].mxu0
    %v410 = vadd.f32 %v336, %v409
    %v411 = vpop.f32.mrb[0].mxu0
    %412 = vdwg.mxu0
    %413 = vmatprep.subr.mxu0 0.0
    %v414 = vand.u32 %v37, 4294901760
    %415 = vmatpush1.xpose.msra.mxu0 %v414
    %416 = vmatprep.subr.mxu0 0.0
    %417 = vmatpush1.xpose.msra.mxu0 0.0
    %418 = vmatprep.subr.mxu0 0.0
    %419 = vmatpush1.xpose.msra.mxu0 0.0
    %420 = vmatprep.subr.mxu0 0.0
    %421 = vmatpush1.xpose.msra.mxu0 0.0
    %422 = vmatprep.subr.mxu0 0.0
    %423 = vmatpush1.xpose.msra.mxu0 0.0
    %424 = vmatprep.subr.mxu0 0.0
    %425 = vmatpush1.xpose.msra.mxu0 0.0
    %426 = vmatprep.subr.mxu0 0.0
    %427 = vmatpush1.xpose.msra.mxu0 0.0
    %428 = vmatprep.subr.mxu0 0.0
    %429 = vmatpush1.xpose.msra.mxu0 0.0
    %430 = vmatprep.subr.mxu0 0.0
    %431 = vmatpush1.xpose.msra.mxu0 0.0
    %432 = vmatprep.subr.mxu0 0.0
    %433 = vmatpush1.xpose.msra.mxu0 0.0
    %434 = vmatprep.subr.mxu0 0.0
    %435 = vmatpush1.xpose.msra.mxu0 0.0
    %436 = vmatprep.subr.mxu0 0.0
    %437 = vmatpush1.xpose.msra.mxu0 0.0
    %438 = vmatprep.subr.mxu0 0.0
    %439 = vmatpush1.xpose.msra.mxu0 0.0
    %440 = vmatprep.subr.mxu0 0.0
    %441 = vmatpush1.xpose.msra.mxu0 0.0
    %442 = vmatprep.subr.mxu0 0.0
    %443 = vmatpush1.xpose.msra.mxu0 0.0
    %444 = vmatprep.subr.mxu0 0.0
    %445 = vmatpush1.xpose.msra.mxu0 0.0
    %446 = vmatprep.subr.mxu0 0.0
    %447 = vmatpush1.xpose.msra.mxu0 0.0
    %448 = vmatprep.subr.mxu0 0.0
    %449 = vmatpush1.xpose.msra.mxu0 0.0
    %450 = vmatprep.subr.mxu0 0.0
    %451 = vmatpush1.xpose.msra.mxu0 0.0
    %452 = vmatprep.subr.mxu0 0.0
    %453 = vmatpush1.xpose.msra.mxu0 0.0
    %454 = vmatprep.subr.mxu0 0.0
    %455 = vmatpush1.xpose.msra.mxu0 0.0
    %456 = vmatprep.subr.mxu0 0.0
    %457 = vmatpush1.xpose.msra.mxu0 0.0
    %458 = vmatprep.subr.mxu0 0.0
    %459 = vmatpush1.xpose.msra.mxu0 0.0
    %460 = vmatprep.subr.mxu0 0.0
    %461 = vmatpush1.xpose.msra.mxu0 0.0
    %462 = vmatprep.subr.mxu0 0.0
    %463 = vmatpush1.xpose.msra.mxu0 0.0
    %464 = vmatprep.subr.mxu0 0.0
    %465 = vmatpush1.xpose.msra.mxu0 0.0
    %466 = vmatprep.subr.mxu0 0.0
    %467 = vmatpush1.xpose.msra.mxu0 0.0
    %468 = vmatprep.subr.mxu0 0.0
    %469 = vmatpush1.xpose.msra.mxu0 0.0
    %470 = vmatprep.subr.mxu0 0.0
    %471 = vmatpush1.xpose.msra.mxu0 0.0
    %472 = vmatprep.subr.mxu0 0.0
    %473 = vmatpush1.xpose.msra.mxu0 0.0
    %474 = vmatprep.subr.mxu0 0.0
    %475 = vmatpush1.xpose.msra.mxu0 0.0
    %476 = vmatprep.subr.mxu0 0.0
    %477 = vmatpush1.xpose.msra.mxu0 0.0
    %478 = vmatprep.mubr.f32.mxu0 0.0
    %v479 = vand.u32 %v34, 4294901760
    %480 = vmatmul.mubr.f32.gmra.mrb[0].mxu0 %v479
    %v481 = vpop.f32.mrb[0].mxu0
    %v482 = vadd.f32 %v410, %v481
    %v483 = vpop.f32.mrb[0].mxu0
    %484 = vdwg.mxu0
    %v486 = vsel %vm32, %v31, 0
    %488 = vmatprep.subr.mxu0 0.0
    %v489 = vand.u32 %v486, 4294901760
    %490 = vmatpush1.xpose.msra.mxu0 %v489
    %491 = vmatprep.subr.mxu0 0.0
    %492 = vmatpush1.xpose.msra.mxu0 0.0
    %493 = vmatprep.subr.mxu0 0.0
    %494 = vmatpush1.xpose.msra.mxu0 0.0
    %495 = vmatprep.subr.mxu0 0.0
    %496 = vmatpush1.xpose.msra.mxu0 0.0
    %497 = vmatprep.subr.mxu0 0.0
    %498 = vmatpush1.xpose.msra.mxu0 0.0
    %499 = vmatprep.subr.mxu0 0.0
    %500 = vmatpush1.xpose.msra.mxu0 0.0
    %501 = vmatprep.subr.mxu0 0.0
    %502 = vmatpush1.xpose.msra.mxu0 0.0
    %503 = vmatprep.subr.mxu0 0.0
    %504 = vmatpush1.xpose.msra.mxu0 0.0
    %505 = vmatprep.subr.mxu0 0.0
    %506 = vmatpush1.xpose.msra.mxu0 0.0
    %507 = vmatprep.subr.mxu0 0.0
    %508 = vmatpush1.xpose.msra.mxu0 0.0
    %509 = vmatprep.subr.mxu0 0.0
    %510 = vmatpush1.xpose.msra.mxu0 0.0
    %511 = vmatprep.subr.mxu0 0.0
    %512 = vmatpush1.xpose.msra.mxu0 0.0
    %513 = vmatprep.subr.mxu0 0.0
    %514 = vmatpush1.xpose.msra.mxu0 0.0
    %515 = vmatprep.subr.mxu0 0.0
    %516 = vmatpush1.xpose.msra.mxu0 0.0
    %517 = vmatprep.subr.mxu0 0.0
    %518 = vmatpush1.xpose.msra.mxu0 0.0
    %519 = vmatprep.subr.mxu0 0.0
    %520 = vmatpush1.xpose.msra.mxu0 0.0
    %521 = vmatprep.subr.mxu0 0.0
    %522 = vmatpush1.xpose.msra.mxu0 0.0
    %523 = vmatprep.subr.mxu0 0.0
    %524 = vmatpush1.xpose.msra.mxu0 0.0
    %525 = vmatprep.subr.mxu0 0.0
    %526 = vmatpush1.xpose.msra.mxu0 0.0
    %527 = vmatprep.subr.mxu0 0.0
    %528 = vmatpush1.xpose.msra.mxu0 0.0
    %529 = vmatprep.subr.mxu0 0.0
    %530 = vmatpush1.xpose.msra.mxu0 0.0
    %531 = vmatprep.subr.mxu0 0.0
    %532 = vmatpush1.xpose.msra.mxu0 0.0
    %533 = vmatprep.subr.mxu0 0.0
    %534 = vmatpush1.xpose.msra.mxu0 0.0
    %535 = vmatprep.subr.mxu0 0.0
    %536 = vmatpush1.xpose.msra.mxu0 0.0
    %537 = vmatprep.subr.mxu0 0.0
    %538 = vmatpush1.xpose.msra.mxu0 0.0
    %539 = vmatprep.subr.mxu0 0.0
    %540 = vmatpush1.xpose.msra.mxu0 0.0
    %541 = vmatprep.subr.mxu0 0.0
    %542 = vmatpush1.xpose.msra.mxu0 0.0
    %543 = vmatprep.subr.mxu0 0.0
    %544 = vmatpush1.xpose.msra.mxu0 0.0
    %545 = vmatprep.subr.mxu0 0.0
    %546 = vmatpush1.xpose.msra.mxu0 0.0
    %547 = vmatprep.subr.mxu0 0.0
    %548 = vmatpush1.xpose.msra.mxu0 0.0
    %549 = vmatprep.subr.mxu0 0.0
    %550 = vmatpush1.xpose.msra.mxu0 0.0
    %551 = vmatprep.subr.mxu0 0.0
    %552 = vmatpush1.xpose.msra.mxu0 0.0
    %553 = vmatprep.mubr.f32.mxu0 0.0
    %v554 = vand.u32 %v34, 4294901760
    %v555 = vsub.f32 %v34, %v554
    %v556 = vand.u32 %v555, 4294901760
    %v557 = vsub.f32 %v555, %v556
    %v558 = vand.u32 %v557, 4294901760
    %559 = vmatmul.mubr.f32.gmra.mrb[0].mxu0 %v558
    %v560 = vpop.f32.mrb[0].mxu0
    %v561 = vadd.f32 0.0, %v560
    %v562 = vpop.f32.mrb[0].mxu0
    %563 = vdwg.mxu0
    %564 = vmatprep.subr.mxu0 0.0
    %v565 = vand.u32 %v486, 4294901760
    %v566 = vsub.f32 %v486, %v565
    %v567 = vand.u32 %v566, 4294901760
    %v568 = vsub.f32 %v566, %v567
    %v569 = vand.u32 %v568, 4294901760
    %570 = vmatpush1.xpose.msra.mxu0 %v569
    %571 = vmatprep.subr.mxu0 0.0
    %572 = vmatpush1.xpose.msra.mxu0 0.0
    %573 = vmatprep.subr.mxu0 0.0
    %574 = vmatpush1.xpose.msra.mxu0 0.0
    %575 = vmatprep.subr.mxu0 0.0
    %576 = vmatpush1.xpose.msra.mxu0 0.0
    %577 = vmatprep.subr.mxu0 0.0
    %578 = vmatpush1.xpose.msra.mxu0 0.0
    %579 = vmatprep.subr.mxu0 0.0
    %580 = vmatpush1.xpose.msra.mxu0 0.0
    %581 = vmatprep.subr.mxu0 0.0
    %582 = vmatpush1.xpose.msra.mxu0 0.0
    %583 = vmatprep.subr.mxu0 0.0
    %584 = vmatpush1.xpose.msra.mxu0 0.0
    %585 = vmatprep.subr.mxu0 0.0
    %586 = vmatpush1.xpose.msra.mxu0 0.0
    %587 = vmatprep.subr.mxu0 0.0
    %588 = vmatpush1.xpose.msra.mxu0 0.0
    %589 = vmatprep.subr.mxu0 0.0
    %590 = vmatpush1.xpose.msra.mxu0 0.0
    %591 = vmatprep.subr.mxu0 0.0
    %592 = vmatpush1.xpose.msra.mxu0 0.0
    %593 = vmatprep.subr.mxu0 0.0
    %594 = vmatpush1.xpose.msra.mxu0 0.0
    %595 = vmatprep.subr.mxu0 0.0
    %596 = vmatpush1.xpose.msra.mxu0 0.0
    %597 = vmatprep.subr.mxu0 0.0
    %598 = vmatpush1.xpose.msra.mxu0 0.0
    %599 = vmatprep.subr.mxu0 0.0
    %600 = vmatpush1.xpose.msra.mxu0 0.0
    %601 = vmatprep.subr.mxu0 0.0
    %602 = vmatpush1.xpose.msra.mxu0 0.0
    %603 = vmatprep.subr.mxu0 0.0
    %604 = vmatpush1.xpose.msra.mxu0 0.0
    %605 = vmatprep.subr.mxu0 0.0
    %606 = vmatpush1.xpose.msra.mxu0 0.0
    %607 = vmatprep.subr.mxu0 0.0
    %608 = vmatpush1.xpose.msra.mxu0 0.0
    %609 = vmatprep.subr.mxu0 0.0
    %610 = vmatpush1.xpose.msra.mxu0 0.0
    %611 = vmatprep.subr.mxu0 0.0
    %612 = vmatpush1.xpose.msra.mxu0 0.0
    %613 = vmatprep.subr.mxu0 0.0
    %614 = vmatpush1.xpose.msra.mxu0 0.0
    %615 = vmatprep.subr.mxu0 0.0
    %616 = vmatpush1.xpose.msra.mxu0 0.0
    %617 = vmatprep.subr.mxu0 0.0
    %618 = vmatpush1.xpose.msra.mxu0 0.0
    %619 = vmatprep.subr.mxu0 0.0
    %620 = vmatpush1.xpose.msra.mxu0 0.0
    %621 = vmatprep.subr.mxu0 0.0
    %622 = vmatpush1.xpose.msra.mxu0 0.0
    %623 = vmatprep.subr.mxu0 0.0
    %624 = vmatpush1.xpose.msra.mxu0 0.0
    %625 = vmatprep.subr.mxu0 0.0
    %626 = vmatpush1.xpose.msra.mxu0 0.0
    %627 = vmatprep.subr.mxu0 0.0
    %628 = vmatpush1.xpose.msra.mxu0 0.0
    %629 = vmatprep.subr.mxu0 0.0
    %630 = vmatpush1.xpose.msra.mxu0 0.0
    %631 = vmatprep.subr.mxu0 0.0
    %632 = vmatpush1.xpose.msra.mxu0 0.0
    %633 = vmatprep.mubr.f32.mxu0 0.0
    %v634 = vand.u32 %v34, 4294901760
    %635 = vmatmul.mubr.f32.gmra.mrb[0].mxu0 %v634
    %v636 = vpop.f32.mrb[0].mxu0
    %v637 = vadd.f32 %v561, %v636
    %v638 = vpop.f32.mrb[0].mxu0
    %639 = vdwg.mxu0
    %640 = vmatprep.subr.mxu0 0.0
    %v641 = vand.u32 %v486, 4294901760
    %v642 = vsub.f32 %v486, %v641
    %643 = vmatpush1.xpose.msra.mxu0 %v642
    %644 = vmatprep.subr.mxu0 0.0
    %645 = vmatpush1.xpose.msra.mxu0 0.0
    %646 = vmatprep.subr.mxu0 0.0
    %647 = vmatpush1.xpose.msra.mxu0 0.0
    %648 = vmatprep.subr.mxu0 0.0
    %649 = vmatpush1.xpose.msra.mxu0 0.0
    %650 = vmatprep.subr.mxu0 0.0
    %651 = vmatpush1.xpose.msra.mxu0 0.0
    %652 = vmatprep.subr.mxu0 0.0
    %653 = vmatpush1.xpose.msra.mxu0 0.0
    %654 = vmatprep.subr.mxu0 0.0
    %655 = vmatpush1.xpose.msra.mxu0 0.0
    %656 = vmatprep.subr.mxu0 0.0
    %657 = vmatpush1.xpose.msra.mxu0 0.0
    %658 = vmatprep.subr.mxu0 0.0
    %659 = vmatpush1.xpose.msra.mxu0 0.0
    %660 = vmatprep.subr.mxu0 0.0
    %661 = vmatpush1.xpose.msra.mxu0 0.0
    %662 = vmatprep.subr.mxu0 0.0
    %663 = vmatpush1.xpose.msra.mxu0 0.0
    %664 = vmatprep.subr.mxu0 0.0
    %665 = vmatpush1.xpose.msra.mxu0 0.0
    %666 = vmatprep.subr.mxu0 0.0
    %667 = vmatpush1.xpose.msra.mxu0 0.0
    %668 = vmatprep.subr.mxu0 0.0
    %669 = vmatpush1.xpose.msra.mxu0 0.0
    %670 = vmatprep.subr.mxu0 0.0
    %671 = vmatpush1.xpose.msra.mxu0 0.0
    %672 = vmatprep.subr.mxu0 0.0
    %673 = vmatpush1.xpose.msra.mxu0 0.0
    %674 = vmatprep.subr.mxu0 0.0
    %675 = vmatpush1.xpose.msra.mxu0 0.0
    %676 = vmatprep.subr.mxu0 0.0
    %677 = vmatpush1.xpose.msra.mxu0 0.0
    %678 = vmatprep.subr.mxu0 0.0
    %679 = vmatpush1.xpose.msra.mxu0 0.0
    %680 = vmatprep.subr.mxu0 0.0
    %681 = vmatpush1.xpose.msra.mxu0 0.0
    %682 = vmatprep.subr.mxu0 0.0
    %683 = vmatpush1.xpose.msra.mxu0 0.0
    %684 = vmatprep.subr.mxu0 0.0
    %685 = vmatpush1.xpose.msra.mxu0 0.0
    %686 = vmatprep.subr.mxu0 0.0
    %687 = vmatpush1.xpose.msra.mxu0 0.0
    %688 = vmatprep.subr.mxu0 0.0
    %689 = vmatpush1.xpose.msra.mxu0 0.0
    %690 = vmatprep.subr.mxu0 0.0
    %691 = vmatpush1.xpose.msra.mxu0 0.0
    %692 = vmatprep.subr.mxu0 0.0
    %693 = vmatpush1.xpose.msra.mxu0 0.0
    %694 = vmatprep.subr.mxu0 0.0
    %695 = vmatpush1.xpose.msra.mxu0 0.0
    %696 = vmatprep.subr.mxu0 0.0
    %697 = vmatpush1.xpose.msra.mxu0 0.0
    %698 = vmatprep.subr.mxu0 0.0
    %699 = vmatpush1.xpose.msra.mxu0 0.0
    %700 = vmatprep.subr.mxu0 0.0
    %701 = vmatpush1.xpose.msra.mxu0 0.0
    %702 = vmatprep.subr.mxu0 0.0
    %703 = vmatpush1.xpose.msra.mxu0 0.0
    %704 = vmatprep.subr.mxu0 0.0
    %705 = vmatpush1.xpose.msra.mxu0 0.0
    %706 = vmatprep.mubr.f32.mxu0 0.0
    %v707 = vand.u32 %v34, 4294901760
    %v708 = vsub.f32 %v34, %v707
    %709 = vmatmul.mubr.f32.gmra.mrb[0].mxu0 %v708
    %v710 = vpop.f32.mrb[0].mxu0
    %v711 = vadd.f32 %v637, %v710
    %v712 = vpop.f32.mrb[0].mxu0
    %713 = vdwg.mxu0
    %714 = vmatprep.subr.mxu0 0.0
    %v715 = vand.u32 %v486, 4294901760
    %716 = vmatpush1.xpose.msra.mxu0 %v715
    %717 = vmatprep.subr.mxu0 0.0
    %718 = vmatpush1.xpose.msra.mxu0 0.0
    %719 = vmatprep.subr.mxu0 0.0
    %720 = vmatpush1.xpose.msra.mxu0 0.0
    %721 = vmatprep.subr.mxu0 0.0
    %722 = vmatpush1.xpose.msra.mxu0 0.0
    %723 = vmatprep.subr.mxu0 0.0
    %724 = vmatpush1.xpose.msra.mxu0 0.0
    %725 = vmatprep.subr.mxu0 0.0
    %726 = vmatpush1.xpose.msra.mxu0 0.0
    %727 = vmatprep.subr.mxu0 0.0
    %728 = vmatpush1.xpose.msra.mxu0 0.0
    %729 = vmatprep.subr.mxu0 0.0
    %730 = vmatpush1.xpose.msra.mxu0 0.0
    %731 = vmatprep.subr.mxu0 0.0
    %732 = vmatpush1.xpose.msra.mxu0 0.0
    %733 = vmatprep.subr.mxu0 0.0
    %734 = vmatpush1.xpose.msra.mxu0 0.0
    %735 = vmatprep.subr.mxu0 0.0
    %736 = vmatpush1.xpose.msra.mxu0 0.0
    %737 = vmatprep.subr.mxu0 0.0
    %738 = vmatpush1.xpose.msra.mxu0 0.0
    %739 = vmatprep.subr.mxu0 0.0
    %740 = vmatpush1.xpose.msra.mxu0 0.0
    %741 = vmatprep.subr.mxu0 0.0
    %742 = vmatpush1.xpose.msra.mxu0 0.0
    %743 = vmatprep.subr.mxu0 0.0
    %744 = vmatpush1.xpose.msra.mxu0 0.0
    %745 = vmatprep.subr.mxu0 0.0
    %746 = vmatpush1.xpose.msra.mxu0 0.0
    %747 = vmatprep.subr.mxu0 0.0
    %748 = vmatpush1.xpose.msra.mxu0 0.0
    %749 = vmatprep.subr.mxu0 0.0
    %750 = vmatpush1.xpose.msra.mxu0 0.0
    %751 = vmatprep.subr.mxu0 0.0
    %752 = vmatpush1.xpose.msra.mxu0 0.0
    %753 = vmatprep.subr.mxu0 0.0
    %754 = vmatpush1.xpose.msra.mxu0 0.0
    %755 = vmatprep.subr.mxu0 0.0
    %756 = vmatpush1.xpose.msra.mxu0 0.0
    %757 = vmatprep.subr.mxu0 0.0
    %758 = vmatpush1.xpose.msra.mxu0 0.0
    %759 = vmatprep.subr.mxu0 0.0
    %760 = vmatpush1.xpose.msra.mxu0 0.0
    %761 = vmatprep.subr.mxu0 0.0
    %762 = vmatpush1.xpose.msra.mxu0 0.0
    %763 = vmatprep.subr.mxu0 0.0
    %764 = vmatpush1.xpose.msra.mxu0 0.0
    %765 = vmatprep.subr.mxu0 0.0
    %766 = vmatpush1.xpose.msra.mxu0 0.0
    %767 = vmatprep.subr.mxu0 0.0
    %768 = vmatpush1.xpose.msra.mxu0 0.0
    %769 = vmatprep.subr.mxu0 0.0
    %770 = vmatpush1.xpose.msra.mxu0 0.0
    %771 = vmatprep.subr.mxu0 0.0
    %772 = vmatpush1.xpose.msra.mxu0 0.0
    %773 = vmatprep.subr.mxu0 0.0
    %774 = vmatpush1.xpose.msra.mxu0 0.0
    %775 = vmatprep.subr.mxu0 0.0
    %776 = vmatpush1.xpose.msra.mxu0 0.0
    %777 = vmatprep.subr.mxu0 0.0
    %778 = vmatpush1.xpose.msra.mxu0 0.0
    %779 = vmatprep.mubr.f32.mxu0 0.0
    %v780 = vand.u32 %v34, 4294901760
    %v781 = vsub.f32 %v34, %v780
    %v782 = vand.u32 %v781, 4294901760
    %783 = vmatmul.mubr.f32.gmra.mrb[0].mxu0 %v782
    %v784 = vpop.f32.mrb[0].mxu0
    %v785 = vadd.f32 %v711, %v784
    %v786 = vpop.f32.mrb[0].mxu0
    %787 = vdwg.mxu0
    %788 = vmatprep.subr.mxu0 0.0
    %v789 = vand.u32 %v486, 4294901760
    %v790 = vsub.f32 %v486, %v789
    %v791 = vand.u32 %v790, 4294901760
    %792 = vmatpush1.xpose.msra.mxu0 %v791
    %793 = vmatprep.subr.mxu0 0.0
    %794 = vmatpush1.xpose.msra.mxu0 0.0
    %795 = vmatprep.subr.mxu0 0.0
    %796 = vmatpush1.xpose.msra.mxu0 0.0
    %797 = vmatprep.subr.mxu0 0.0
    %798 = vmatpush1.xpose.msra.mxu0 0.0
    %799 = vmatprep.subr.mxu0 0.0
    %800 = vmatpush1.xpose.msra.mxu0 0.0
    %801 = vmatprep.subr.mxu0 0.0
    %802 = vmatpush1.xpose.msra.mxu0 0.0
    %803 = vmatprep.subr.mxu0 0.0
    %804 = vmatpush1.xpose.msra.mxu0 0.0
    %805 = vmatprep.subr.mxu0 0.0
    %806 = vmatpush1.xpose.msra.mxu0 0.0
    %807 = vmatprep.subr.mxu0 0.0
    %808 = vmatpush1.xpose.msra.mxu0 0.0
    %809 = vmatprep.subr.mxu0 0.0
    %810 = vmatpush1.xpose.msra.mxu0 0.0
    %811 = vmatprep.subr.mxu0 0.0
    %812 = vmatpush1.xpose.msra.mxu0 0.0
    %813 = vmatprep.subr.mxu0 0.0
    %814 = vmatpush1.xpose.msra.mxu0 0.0
    %815 = vmatprep.subr.mxu0 0.0
    %816 = vmatpush1.xpose.msra.mxu0 0.0
    %817 = vmatprep.subr.mxu0 0.0
    %818 = vmatpush1.xpose.msra.mxu0 0.0
    %819 = vmatprep.subr.mxu0 0.0
    %820 = vmatpush1.xpose.msra.mxu0 0.0
    %821 = vmatprep.subr.mxu0 0.0
    %822 = vmatpush1.xpose.msra.mxu0 0.0
    %823 = vmatprep.subr.mxu0 0.0
    %824 = vmatpush1.xpose.msra.mxu0 0.0
    %825 = vmatprep.subr.mxu0 0.0
    %826 = vmatpush1.xpose.msra.mxu0 0.0
    %827 = vmatprep.subr.mxu0 0.0
    %828 = vmatpush1.xpose.msra.mxu0 0.0
    %829 = vmatprep.subr.mxu0 0.0
    %830 = vmatpush1.xpose.msra.mxu0 0.0
    %831 = vmatprep.subr.mxu0 0.0
    %832 = vmatpush1.xpose.msra.mxu0 0.0
    %833 = vmatprep.subr.mxu0 0.0
    %834 = vmatpush1.xpose.msra.mxu0 0.0
    %835 = vmatprep.subr.mxu0 0.0
    %836 = vmatpush1.xpose.msra.mxu0 0.0
    %837 = vmatprep.subr.mxu0 0.0
    %838 = vmatpush1.xpose.msra.mxu0 0.0
    %839 = vmatprep.subr.mxu0 0.0
    %840 = vmatpush1.xpose.msra.mxu0 0.0
    %841 = vmatprep.subr.mxu0 0.0
    %842 = vmatpush1.xpose.msra.mxu0 0.0
    %843 = vmatprep.subr.mxu0 0.0
    %844 = vmatpush1.xpose.msra.mxu0 0.0
    %845 = vmatprep.subr.mxu0 0.0
    %846 = vmatpush1.xpose.msra.mxu0 0.0
    %847 = vmatprep.subr.mxu0 0.0
    %848 = vmatpush1.xpose.msra.mxu0 0.0
    %849 = vmatprep.subr.mxu0 0.0
    %850 = vmatpush1.xpose.msra.mxu0 0.0
    %851 = vmatprep.subr.mxu0 0.0
    %852 = vmatpush1.xpose.msra.mxu0 0.0
    %853 = vmatprep.subr.mxu0 0.0
    %854 = vmatpush1.xpose.msra.mxu0 0.0
    %855 = vmatprep.mubr.f32.mxu0 0.0
    %v856 = vand.u32 %v34, 4294901760
    %857 = vmatmul.mubr.f32.gmra.mrb[0].mxu0 %v856
    %v858 = vpop.f32.mrb[0].mxu0
    %v859 = vadd.f32 %v785, %v858
    %v860 = vpop.f32.mrb[0].mxu0
    %861 = vdwg.mxu0
    %862 = vmatprep.subr.mxu0 0.0
    %v863 = vand.u32 %v486, 4294901760
    %864 = vmatpush1.xpose.msra.mxu0 %v863
    %865 = vmatprep.subr.mxu0 0.0
    %866 = vmatpush1.xpose.msra.mxu0 0.0
    %867 = vmatprep.subr.mxu0 0.0
    %868 = vmatpush1.xpose.msra.mxu0 0.0
    %869 = vmatprep.subr.mxu0 0.0
    %870 = vmatpush1.xpose.msra.mxu0 0.0
    %871 = vmatprep.subr.mxu0 0.0
    %872 = vmatpush1.xpose.msra.mxu0 0.0
    %873 = vmatprep.subr.mxu0 0.0
    %874 = vmatpush1.xpose.msra.mxu0 0.0
    %875 = vmatprep.subr.mxu0 0.0
    %876 = vmatpush1.xpose.msra.mxu0 0.0
    %877 = vmatprep.subr.mxu0 0.0
    %878 = vmatpush1.xpose.msra.mxu0 0.0
    %879 = vmatprep.subr.mxu0 0.0
    %880 = vmatpush1.xpose.msra.mxu0 0.0
    %881 = vmatprep.subr.mxu0 0.0
    %882 = vmatpush1.xpose.msra.mxu0 0.0
    %883 = vmatprep.subr.mxu0 0.0
    %884 = vmatpush1.xpose.msra.mxu0 0.0
    %885 = vmatprep.subr.mxu0 0.0
    %886 = vmatpush1.xpose.msra.mxu0 0.0
    %887 = vmatprep.subr.mxu0 0.0
    %888 = vmatpush1.xpose.msra.mxu0 0.0
    %889 = vmatprep.subr.mxu0 0.0
    %890 = vmatpush1.xpose.msra.mxu0 0.0
    %891 = vmatprep.subr.mxu0 0.0
    %892 = vmatpush1.xpose.msra.mxu0 0.0
    %893 = vmatprep.subr.mxu0 0.0
    %894 = vmatpush1.xpose.msra.mxu0 0.0
    %895 = vmatprep.subr.mxu0 0.0
    %896 = vmatpush1.xpose.msra.mxu0 0.0
    %897 = vmatprep.subr.mxu0 0.0
    %898 = vmatpush1.xpose.msra.mxu0 0.0
    %899 = vmatprep.subr.mxu0 0.0
    %900 = vmatpush1.xpose.msra.mxu0 0.0
    %901 = vmatprep.subr.mxu0 0.0
    %902 = vmatpush1.xpose.msra.mxu0 0.0
    %903 = vmatprep.subr.mxu0 0.0
    %904 = vmatpush1.xpose.msra.mxu0 0.0
    %905 = vmatprep.subr.mxu0 0.0
    %906 = vmatpush1.xpose.msra.mxu0 0.0
    %907 = vmatprep.subr.mxu0 0.0
    %908 = vmatpush1.xpose.msra.mxu0 0.0
    %909 = vmatprep.subr.mxu0 0.0
    %910 = vmatpush1.xpose.msra.mxu0 0.0
    %911 = vmatprep.subr.mxu0 0.0
    %912 = vmatpush1.xpose.msra.mxu0 0.0
    %913 = vmatprep.subr.mxu0 0.0
    %914 = vmatpush1.xpose.msra.mxu0 0.0
    %915 = vmatprep.subr.mxu0 0.0
    %916 = vmatpush1.xpose.msra.mxu0 0.0
    %917 = vmatprep.subr.mxu0 0.0
    %918 = vmatpush1.xpose.msra.mxu0 0.0
    %919 = vmatprep.subr.mxu0 0.0
    %920 = vmatpush1.xpose.msra.mxu0 0.0
    %921 = vmatprep.subr.mxu0 0.0
    %922 = vmatpush1.xpose.msra.mxu0 0.0
    %923 = vmatprep.subr.mxu0 0.0
    %924 = vmatpush1.xpose.msra.mxu0 0.0
    %925 = vmatprep.subr.mxu0 0.0
    %926 = vmatpush1.xpose.msra.mxu0 0.0
    %927 = vmatprep.mubr.f32.mxu0 0.0
    %v928 = vand.u32 %v34, 4294901760
    %929 = vmatmul.mubr.f32.gmra.mrb[0].mxu0 %v928
    %v930 = vpop.f32.mrb[0].mxu0
    %v931 = vadd.f32 %v859, %v930
    %v932 = vpop.f32.mrb[0].mxu0
    %933 = vdwg.mxu0
    %v934 = vld [vmem:[%s1] sm:$0x1]
    %v935 = vld [vmem:[%s1 + $0x1] sm:$0x1]
    %vm936 = vcmp.gt.f32.partialorder %v934, 0.5
    %vm937 = vcmp.gt.f32.partialorder %v935, 0.5
    %v938 = vsel %vm936, -inf, %v482
    %v939 = vsel %vm937, -inf, %v931
    %vm940 = vcmask 57344
    %v941 = vsel %vm940, %v938, -inf
    %942 = vmax.xlane.f32.xlu0 %v941
    %v943 = vpop.xlane.xlu0 %942
    %v944 = vsel %vm940, %v939, -inf
    %945 = vmax.xlane.f32.xlu0 %v944
    %v946 = vpop.xlane.xlu0 %945
    %v947 = vsub.f32 %v938, %v943
    %v948 = vsub.f32 %v939, %v946
    %v949 = vmul.f32 %v947, 1.442695
    %v950 = vpow.pop %v949
    %v951 = vmul.f32 %v948, 1.442695
    %v952 = vpow.pop %v951
    %v953 = vsel %vm940, %v950, 0.0
    %954 = vadd.xlane.f32.xlu0 %v953
    %v955 = vpop.xlane.xlu0 %954
    %v956 = vsel %vm940, %v952, 0.0
    %957 = vadd.xlane.f32.xlu0 %v956
    %v958 = vpop.xlane.xlu0 %957
    %v959 = vrcp.pop %v955
    %v960 = vrcp.pop %v958
    %v961 = vmul.f32 %v950, %v959
    %v962 = vmul.f32 %v952, %v960
    %963 = vst.msk [vmem:[#allocation5] sm:$0x1] %vm940, %v961
    %964 = vst.msk [vmem:[#allocation5 + $0x1] sm:$0x1] %vm940, %v962
    // Predicated region
    $region18: #{tpu_custom_call.1} parent=1 // pred_check
      _
    $region19: #{tpu_custom_call.1} parent=1 // pred_check_branch
      %966 = sbr.rel (0) target = $region21
    $region20: #{tpu_custom_call.1} parent=1 // pred_region
      %s968 = ssub.s32 32, 32
      %969 = vsyncadd [#allocation4], %s968
      %s970 = sshll.u32 [#allocation5], 4
      %s971 = int_to_ptr.vmem [resolvable:$true] %s970
      %976 = dma.vmem_to_hbm [thread:$0]  %s971, 32, %s3, [#allocation4], 16, 16, 1
    $region21: #{tpu_custom_call.1} parent=1 // pred_fallthru
      _
    // Predicated region
    $region22: #{tpu_custom_call.1} parent=1 // pred_check
      _
    $region23: #{tpu_custom_call.1} parent=1 // pred_check_branch
      %978 = sbr.rel (0) target = $region25
    $region24: #{tpu_custom_call.1} parent=1 // pred_region
      %979 = dma.done [#allocation4], 32
    $region25: #{tpu_custom_call.1} parent=1 // pred_fallthru
      _
    %980 = vsyncpa [#allocation3], 1
    %981 = vsyncpa [#allocation4], 1

</llo_original>
